<compile_context>
chip_gen: v6e
topology: v6e:2x2x1
jax: 0.10.0
libtpu: 0.0.40
codegen_flags: <defaults>
</compile_context>

<pallas_src>
import functools

import jax
import jax.numpy as jnp
import numpy as np
from jax import lax
from jax.experimental import pallas as pl
from jax.experimental.pallas import tpu as pltpu

_LANE = 128


def _complex_maxpool_kernel(x_ref, o_ref, *scratch, K, S, P, H, W, OH, OW):
    """One grid step: pools `tile_n` lane-dim planes for all output rows.

    x_ref:  (2, H, W, tile_n)   VMEM block; [0]=real planes, [1]=imag planes.
    o_ref:  (2, OH, OW, tile_n) VMEM block.
    scratch (only when P > 0): (2, H+2P, W+2P, tile_n) VMEM pad buffer.
    """
    tile_n = x_ref.shape[-1]

    if P > 0:
        pad_ref = scratch[0]
        # Re-zero every grid step: the "parallel" grid axis may be sharded
        # across TensorCores, so a program_id()==0 one-time init is not safe.
        # This is pure VMEM traffic; the interior is overwritten right below.
        pad_ref[...] = jnp.zeros_like(pad_ref)
        pad_ref[:, pl.ds(P, H), pl.ds(P, W), :] = x_ref[...]
        src = pad_ref
    else:
        src = x_ref

    re_src, im_src = src.at[0], src.at[1]
    o_re, o_im = o_ref.at[0], o_ref.at[1]

    def col_window(ref, row, dj):
        # Static strided window over the sublane (W) dim, full (dense) lane dim.
        if S == 1:
            return ref[row, pl.ds(dj, OW), :]
        return ref[row, pl.ds(dj, OW, stride=S), :]

    # Loop over output rows so the running arg-max state stays in vregs
    # (register-blocked accumulators) instead of round-tripping through VMEM.
    @pl.loop(0, OH)
    def _(oh):
        best_sq = jnp.full((OW, tile_n), -1.0, dtype=jnp.float32)
        best_re = jnp.zeros((OW, tile_n), dtype=jnp.float32)
        best_im = jnp.zeros((OW, tile_n), dtype=jnp.float32)
        # Static K*K window loop in row-major order: strict ">" reproduces
        # PyTorch's first-max tie rule.
        for di in range(K):
            row = oh * S + di
            for dj in range(K):
                r = col_window(re_src, row, dj)
                i = col_window(im_src, row, dj)
                m = r * r + i * i          # squared magnitude: same argmax as |x|
                sel = m > best_sq
                best_re = jnp.where(sel, r, best_re)
                best_im = jnp.where(sel, i, best_im)
                best_sq = jnp.where(sel, m, best_sq)
        o_re[oh, :, :] = best_re
        o_im[oh, :, :] = best_im


def _plan_lane_tiles(n_pad, H, W, Hp, Wp, OH, OW, P):
    """Pick the lane tile (multiple of 128) against the per-core VMEM budget."""
    try:
        cap = int(getattr(pltpu.get_tpu_info(), "vmem_capacity_bytes",
                          64 * 1024 * 1024))
    except Exception:
        cap = 64 * 1024 * 1024          # size for the smallest generation (v7x)
    budget = cap // 2                   # headroom for temporaries / pipeline slack

    def vmem_bytes(t):
        in_blk = 2 * H * W * t * 4              # (2, H, W, t) f32
        out_blk = 2 * OH * OW * t * 4           # (2, OH, OW, t) f32
        pad_blk = 2 * Hp * Wp * t * 4 if P > 0 else 0   # single pad scratch
        return 2 * in_blk + 2 * out_blk + pad_blk       # in/out double-buffered

    cands = [c for c in (2048, 1024, 512, 384, 256, 128) if n_pad % c == 0]
    tile = None
    for c in cands:                     # prefer >= 2 grid steps (both v7x TCs)
        if vmem_bytes(c) <= budget and n_pad // c >= 2:
            tile = c
            break
    if tile is None:
        for c in cands:                 # else the biggest tile that still fits
            if vmem_bytes(c) <= budget:
                tile = c
                break
    if tile is None:
        # TODO(synk): tile the grid over output-row blocks when even a single
        # 128-lane block of the full plane overflows VMEM (very large H*W).
        tile = _LANE
    vmem_limit = int(min(cap, max(vmem_bytes(tile) * 5 // 4, 32 * 1024 * 1024)))
    return tile, n_pad // tile, vmem_limit


@functools.partial(jax.jit, static_argnums=(1, 2, 3))
def complex_maxpool2d(x, kernel_size: int, stride: int, padding: int):
    """x: complex64 array (B, C, H, W). Returns complex64 (B, C, OH, OW)."""
    B, C, H, W = x.shape
    K, S, P = int(kernel_size), int(stride), int(padding)
    Hp, Wp = H + 2 * P, W + 2 * P
    OH = (Hp - K) // S + 1
    OW = (Wp - K) // S + 1
    N = B * C
    n_pad = ((N + _LANE - 1) // _LANE) * _LANE

    # One fused relayout pass: complex (B,C,H,W) -> packed f32 (2, H, W, n_pad)
    # with the planes (B*C, zero-padded to a lane multiple) dense on the lane
    # dim.  No spatial jnp.pad here; padding is fused into the kernel.
    xf = jnp.stack([jnp.real(x), jnp.imag(x)], axis=0).astype(jnp.float32)
    xf = xf.reshape(2, N, H, W)
    if n_pad != N:
        xf = jnp.pad(xf, ((0, 0), (0, n_pad - N), (0, 0), (0, 0)))
    xf = xf.transpose(0, 2, 3, 1)                     # (2, H, W, n_pad)

    tile_n, grid_n, vmem_limit = _plan_lane_tiles(n_pad, H, W, Hp, Wp, OH, OW, P)

    kernel = functools.partial(_complex_maxpool_kernel,
                               K=K, S=S, P=P, H=H, W=W, OH=OH, OW=OW)
    in_spec = pl.BlockSpec((2, H, W, tile_n), lambda n: (0, 0, 0, n))
    out_spec = pl.BlockSpec((2, OH, OW, tile_n), lambda n: (0, 0, 0, n))
    scratch = ([pltpu.VMEM((2, Hp, Wp, tile_n), jnp.float32)] if P > 0 else [])

    out = pl.pallas_call(
        kernel,
        out_shape=jax.ShapeDtypeStruct((2, OH, OW, n_pad), jnp.float32),
        grid_spec=pltpu.PrefetchScalarGridSpec(
            num_scalar_prefetch=0,
            grid=(grid_n,),
            in_specs=[in_spec],
            out_specs=out_spec,
            scratch_shapes=scratch),
        compiler_params=pltpu.CompilerParams(
            dimension_semantics=("parallel",),
            vmem_limit_bytes=vmem_limit),
    )(xf)

    # One fused relayout pass back: (2, OH, OW, n_pad) -> complex (B, C, OH, OW).
    out = out[..., :N]
    out_c = lax.complex(out[0], out[1])               # (OH, OW, N)
    return out_c.transpose(2, 0, 1).reshape(B, C, OH, OW)


def _reference(x, K, S, P):
    """Pure numpy reference mirroring the PyTorch module semantics."""
    xn = np.asarray(x)
    B, C, H, W = xn.shape
    Hp, Wp = H + 2 * P, W + 2 * P
    magp = np.full((B, C, Hp, Wp), -np.inf, dtype=np.float32)
    magp[:, :, P:P + H, P:P + W] = np.abs(xn)
    xp = np.zeros((B, C, Hp, Wp), dtype=np.complex64)
    xp[:, :, P:P + H, P:P + W] = xn
    OH = (Hp - K) // S + 1
    OW = (Wp - K) // S + 1
    out = np.zeros((B, C, OH, OW), dtype=np.complex64)
    for b in range(B):
        for c in range(C):
            for oh in range(OH):
                for ow in range(OW):
                    wmag = magp[b, c, oh * S:oh * S + K, ow * S:ow * S + K]
                    wx = xp[b, c, oh * S:oh * S + K, ow * S:ow * S + K]
                    idx = np.argmax(wmag)      # first max in row-major order
                    v = wx.reshape(-1)[idx]
                    # magnitude * exp(1j * phase) == selected complex value
                    out[b, c, oh, ow] = np.abs(v) * np.exp(1j * np.angle(v))
    return out


if __name__ == "__main__":
    # Module config (from __init__ args): kernel_size=3, stride=2, padding=1
    KSIZE, STRIDE, PAD = 3, 2, 1
    B, C, H, W = 2, 4, 16, 16

    key = jax.random.PRNGKey(0)
    kr, ki = jax.random.split(key)
    x_re = jax.random.normal(kr, (B, C, H, W), dtype=jnp.float32)
    x_im = jax.random.normal(ki, (B, C, H, W), dtype=jnp.float32)
    x = lax.complex(x_re, x_im)                       # complex64, NCHW

    out = complex_maxpool2d(x, KSIZE, STRIDE, PAD)
    out = jax.block_until_ready(out)

    # Sanity check against a pure-numpy reference of the PyTorch forward.
    ref = _reference(np.asarray(x), KSIZE, STRIDE, PAD)
    assert out.shape == ref.shape and out.dtype == jnp.complex64
    np.testing.assert_allclose(np.asarray(out), ref, rtol=1e-5, atol=1e-5)

    print("KERNEL_OK")
</pallas_src>

<mosaic_0001>
module attributes {stable_mosaic.version = 11 : i64} {
  func.func @_complex_maxpool_kernel(%arg0: i32, %arg1: memref<2x16x16x128xf32, #tpu.memory_space<vmem>>, %arg2: memref<2x8x8x128xf32, #tpu.memory_space<vmem>>, %arg3: memref<2x18x18x128xf32, #tpu.memory_space<vmem>>) attributes {dimension_semantics = [#tpu.dimension_semantics<parallel>], iteration_bounds = array<i64: 1>, scalar_prefetch = 0 : i64, scratch_operands = 1 : i64, tpu.core_type = #tpu.core_type<tc>, window_params = [{transform_indices = @transform_0, window_bounds = array<i64: 2, 16, 16, 128>}, {transform_indices = @transform_1, window_bounds = array<i64: 2, 8, 8, 128>}]} {
    %cst = arith.constant 0.000000e+00 : f32
    %0 = vector.broadcast %cst : f32 to vector<2x18x18x128xf32>
    %c0 = arith.constant 0 : index
    %c0_0 = arith.constant 0 : index
    %c0_1 = arith.constant 0 : index
    %c0_2 = arith.constant 0 : index
    %1 = vector.load %arg3[%c0, %c0_0, %c0_1, %c0_2] : memref<2x18x18x128xf32, #tpu.memory_space<vmem>>, vector<2x18x18x128xf32>
    tpu.vector_store %arg3[%c0, %c0_0, %c0_1, %c0_2], %0 {strides = array<i32>} : memref<2x18x18x128xf32, #tpu.memory_space<vmem>>, vector<2x18x18x128xf32>,
    %c0_3 = arith.constant 0 : index
    %c0_4 = arith.constant 0 : index
    %c0_5 = arith.constant 0 : index
    %c0_6 = arith.constant 0 : index
    %2 = vector.load %arg1[%c0_3, %c0_4, %c0_5, %c0_6] : memref<2x16x16x128xf32, #tpu.memory_space<vmem>>, vector<2x16x16x128xf32>
    %c0_7 = arith.constant 0 : index
    %c1 = arith.constant 1 : index
    %c1_8 = arith.constant 1 : index
    %c0_9 = arith.constant 0 : index
    %3 = vector.load %arg3[%c0_7, %c1, %c1_8, %c0_9] : memref<2x18x18x128xf32, #tpu.memory_space<vmem>>, vector<2x16x16x128xf32>
    tpu.vector_store %arg3[%c0_7, %c1, %c1_8, %c0_9], %2 {strides = array<i32>} : memref<2x18x18x128xf32, #tpu.memory_space<vmem>>, vector<2x16x16x128xf32>,
    %c0_i32 = arith.constant 0 : i32
    %c1_i32 = arith.constant 1 : i32
    %c0_i32_10 = arith.constant 0 : i32
    %c1_i32_11 = arith.constant 1 : i32
    %c0_i32_12 = arith.constant 0 : i32
    %c8_i32 = arith.constant 8 : i32
    %4 = arith.addi %c0_i32_12, %c8_i32 : i32
    %c1_i32_13 = arith.constant 1 : i32
    scf.for %arg4 = %c0_i32_12 to %4 step %c1_i32_13  : i32 {
      %c1_i32_15 = arith.constant 1 : i32
      %5 = arith.muli %arg4, %c1_i32_15 : i32
      %c0_i32_16 = arith.constant 0 : i32
      %6 = arith.addi %c0_i32_16, %5 : i32
      %cst_17 = arith.constant -1.000000e+00 : f32
      %7 = vector.broadcast %cst_17 : f32 to vector<8x128xf32>
      %cst_18 = arith.constant 0.000000e+00 : f32
      %8 = vector.broadcast %cst_18 : f32 to vector<8x128xf32>
      %cst_19 = arith.constant 0.000000e+00 : f32
      %9 = vector.broadcast %cst_19 : f32 to vector<8x128xf32>
      %c2_i32 = arith.constant 2 : i32
      %10 = arith.muli %6, %c2_i32 : i32
      %c0_i32_20 = arith.constant 0 : i32
      %11 = arith.addi %10, %c0_i32_20 : i32
      %c0_i32_21 = arith.constant 0 : i32
      %c0_i32_22 = arith.constant 0 : i32
      %c0_i32_23 = arith.constant 0 : i32
      %12 = tpu.memref_slice %arg3[%c0_i32, %c0_i32_21, %c0_i32_22, %c0_i32_23] : memref<2x18x18x128xf32, #tpu.memory_space<vmem>> -> memref<1x18x18x128xf32, #tpu.memory_space<vmem>>
      %13 = tpu.memref_squeeze %12 : memref<1x18x18x128xf32, #tpu.memory_space<vmem>> -> memref<18x18x128xf32, #tpu.memory_space<vmem>>
      %14 = arith.index_cast %11 : i32 to index
      %c0_24 = arith.constant 0 : index
      %c0_25 = arith.constant 0 : index
      %15 = tpu.strided_load %13[%14, %c0_24, %c0_25] {strides = array<i32: 1, 2, 1>} : memref<18x18x128xf32, #tpu.memory_space<vmem>>, vector<1x8x128xf32>
      %16 = vector.shape_cast %15 : vector<1x8x128xf32> to vector<8x128xf32>
      %c0_i32_26 = arith.constant 0 : i32
      %c0_i32_27 = arith.constant 0 : i32
      %c0_i32_28 = arith.constant 0 : i32
      %17 = tpu.memref_slice %arg3[%c1_i32, %c0_i32_26, %c0_i32_27, %c0_i32_28] : memref<2x18x18x128xf32, #tpu.memory_space<vmem>> -> memref<1x18x18x128xf32, #tpu.memory_space<vmem>>
      %18 = tpu.memref_squeeze %17 : memref<1x18x18x128xf32, #tpu.memory_space<vmem>> -> memref<18x18x128xf32, #tpu.memory_space<vmem>>
      %19 = arith.index_cast %11 : i32 to index
      %c0_29 = arith.constant 0 : index
      %c0_30 = arith.constant 0 : index
      %20 = tpu.strided_load %18[%19, %c0_29, %c0_30] {strides = array<i32: 1, 2, 1>} : memref<18x18x128xf32, #tpu.memory_space<vmem>>, vector<1x8x128xf32>
      %21 = vector.shape_cast %20 : vector<1x8x128xf32> to vector<8x128xf32>
      %22 = arith.mulf %16, %16 : vector<8x128xf32>
      %23 = arith.mulf %21, %21 : vector<8x128xf32>
      %24 = arith.addf %22, %23 : vector<8x128xf32>
      %25 = arith.cmpf ogt, %24, %7 : vector<8x128xf32>
      %26 = arith.select %25, %16, %8 : vector<8x128xi1>, vector<8x128xf32>
      %27 = arith.select %25, %21, %9 : vector<8x128xi1>, vector<8x128xf32>
      %28 = arith.select %25, %24, %7 : vector<8x128xi1>, vector<8x128xf32>
      %c0_i32_31 = arith.constant 0 : i32
      %c0_i32_32 = arith.constant 0 : i32
      %c0_i32_33 = arith.constant 0 : i32
      %29 = tpu.memref_slice %arg3[%c0_i32, %c0_i32_31, %c0_i32_32, %c0_i32_33] : memref<2x18x18x128xf32, #tpu.memory_space<vmem>> -> memref<1x18x18x128xf32, #tpu.memory_space<vmem>>
      %30 = tpu.memref_squeeze %29 : memref<1x18x18x128xf32, #tpu.memory_space<vmem>> -> memref<18x18x128xf32, #tpu.memory_space<vmem>>
      %31 = arith.index_cast %11 : i32 to index
      %c1_34 = arith.constant 1 : index
      %c0_35 = arith.constant 0 : index
      %32 = tpu.strided_load %30[%31, %c1_34, %c0_35] {strides = array<i32: 1, 2, 1>} : memref<18x18x128xf32, #tpu.memory_space<vmem>>, vector<1x8x128xf32>
      %33 = vector.shape_cast %32 : vector<1x8x128xf32> to vector<8x128xf32>
      %c0_i32_36 = arith.constant 0 : i32
      %c0_i32_37 = arith.constant 0 : i32
      %c0_i32_38 = arith.constant 0 : i32
      %34 = tpu.memref_slice %arg3[%c1_i32, %c0_i32_36, %c0_i32_37, %c0_i32_38] : memref<2x18x18x128xf32, #tpu.memory_space<vmem>> -> memref<1x18x18x128xf32, #tpu.memory_space<vmem>>
      %35 = tpu.memref_squeeze %34 : memref<1x18x18x128xf32, #tpu.memory_space<vmem>> -> memref<18x18x128xf32, #tpu.memory_space<vmem>>
      %36 = arith.index_cast %11 : i32 to index
      %c1_39 = arith.constant 1 : index
      %c0_40 = arith.constant 0 : index
      %37 = tpu.strided_load %35[%36, %c1_39, %c0_40] {strides = array<i32: 1, 2, 1>} : memref<18x18x128xf32, #tpu.memory_space<vmem>>, vector<1x8x128xf32>
      %38 = vector.shape_cast %37 : vector<1x8x128xf32> to vector<8x128xf32>
      %39 = arith.mulf %33, %33 : vector<8x128xf32>
      %40 = arith.mulf %38, %38 : vector<8x128xf32>
      %41 = arith.addf %39, %40 : vector<8x128xf32>
      %42 = arith.cmpf ogt, %41, %28 : vector<8x128xf32>
      %43 = arith.select %42, %33, %26 : vector<8x128xi1>, vector<8x128xf32>
      %44 = arith.select %42, %38, %27 : vector<8x128xi1>, vector<8x128xf32>
      %45 = arith.select %42, %41, %28 : vector<8x128xi1>, vector<8x128xf32>
      %c0_i32_41 = arith.constant 0 : i32
      %c0_i32_42 = arith.constant 0 : i32
      %c0_i32_43 = arith.constant 0 : i32
      %46 = tpu.memref_slice %arg3[%c0_i32, %c0_i32_41, %c0_i32_42, %c0_i32_43] : memref<2x18x18x128xf32, #tpu.memory_space<vmem>> -> memref<1x18x18x128xf32, #tpu.memory_space<vmem>>
      %47 = tpu.memref_squeeze %46 : memref<1x18x18x128xf32, #tpu.memory_space<vmem>> -> memref<18x18x128xf32, #tpu.memory_space<vmem>>
      %48 = arith.index_cast %11 : i32 to index
      %c2 = arith.constant 2 : index
      %c0_44 = arith.constant 0 : index
      %49 = tpu.strided_load %47[%48, %c2, %c0_44] {strides = array<i32: 1, 2, 1>} : memref<18x18x128xf32, #tpu.memory_space<vmem>>, vector<1x8x128xf32>
      %50 = vector.shape_cast %49 : vector<1x8x128xf32> to vector<8x128xf32>
      %c0_i32_45 = arith.constant 0 : i32
      %c0_i32_46 = arith.constant 0 : i32
      %c0_i32_47 = arith.constant 0 : i32
      %51 = tpu.memref_slice %arg3[%c1_i32, %c0_i32_45, %c0_i32_46, %c0_i32_47] : memref<2x18x18x128xf32, #tpu.memory_space<vmem>> -> memref<1x18x18x128xf32, #tpu.memory_space<vmem>>
      %52 = tpu.memref_squeeze %51 : memref<1x18x18x128xf32, #tpu.memory_space<vmem>> -> memref<18x18x128xf32, #tpu.memory_space<vmem>>
      %53 = arith.index_cast %11 : i32 to index
      %c2_48 = arith.constant 2 : index
      %c0_49 = arith.constant 0 : index
      %54 = tpu.strided_load %52[%53, %c2_48, %c0_49] {strides = array<i32: 1, 2, 1>} : memref<18x18x128xf32, #tpu.memory_space<vmem>>, vector<1x8x128xf32>
      %55 = vector.shape_cast %54 : vector<1x8x128xf32> to vector<8x128xf32>
      %56 = arith.mulf %50, %50 : vector<8x128xf32>
      %57 = arith.mulf %55, %55 : vector<8x128xf32>
      %58 = arith.addf %56, %57 : vector<8x128xf32>
      %59 = arith.cmpf ogt, %58, %45 : vector<8x128xf32>
      %60 = arith.select %59, %50, %43 : vector<8x128xi1>, vector<8x128xf32>
      %61 = arith.select %59, %55, %44 : vector<8x128xi1>, vector<8x128xf32>
      %62 = arith.select %59, %58, %45 : vector<8x128xi1>, vector<8x128xf32>
      %c2_i32_50 = arith.constant 2 : i32
      %63 = arith.muli %6, %c2_i32_50 : i32
      %c1_i32_51 = arith.constant 1 : i32
      %64 = arith.addi %63, %c1_i32_51 : i32
      %c0_i32_52 = arith.constant 0 : i32
      %c0_i32_53 = arith.constant 0 : i32
      %c0_i32_54 = arith.constant 0 : i32
      %65 = tpu.memref_slice %arg3[%c0_i32, %c0_i32_52, %c0_i32_53, %c0_i32_54] : memref<2x18x18x128xf32, #tpu.memory_space<vmem>> -> memref<1x18x18x128xf32, #tpu.memory_space<vmem>>
      %66 = tpu.memref_squeeze %65 : memref<1x18x18x128xf32, #tpu.memory_space<vmem>> -> memref<18x18x128xf32, #tpu.memory_space<vmem>>
      %67 = arith.index_cast %64 : i32 to index
      %c0_55 = arith.constant 0 : index
      %c0_56 = arith.constant 0 : index
      %68 = tpu.strided_load %66[%67, %c0_55, %c0_56] {strides = array<i32: 1, 2, 1>} : memref<18x18x128xf32, #tpu.memory_space<vmem>>, vector<1x8x128xf32>
      %69 = vector.shape_cast %68 : vector<1x8x128xf32> to vector<8x128xf32>
      %c0_i32_57 = arith.constant 0 : i32
      %c0_i32_58 = arith.constant 0 : i32
      %c0_i32_59 = arith.constant 0 : i32
      %70 = tpu.memref_slice %arg3[%c1_i32, %c0_i32_57, %c0_i32_58, %c0_i32_59] : memref<2x18x18x128xf32, #tpu.memory_space<vmem>> -> memref<1x18x18x128xf32, #tpu.memory_space<vmem>>
      %71 = tpu.memref_squeeze %70 : memref<1x18x18x128xf32, #tpu.memory_space<vmem>> -> memref<18x18x128xf32, #tpu.memory_space<vmem>>
      %72 = arith.index_cast %64 : i32 to index
      %c0_60 = arith.constant 0 : index
      %c0_61 = arith.constant 0 : index
      %73 = tpu.strided_load %71[%72, %c0_60, %c0_61] {strides = array<i32: 1, 2, 1>} : memref<18x18x128xf32, #tpu.memory_space<vmem>>, vector<1x8x128xf32>
      %74 = vector.shape_cast %73 : vector<1x8x128xf32> to vector<8x128xf32>
      %75 = arith.mulf %69, %69 : vector<8x128xf32>
      %76 = arith.mulf %74, %74 : vector<8x128xf32>
      %77 = arith.addf %75, %76 : vector<8x128xf32>
      %78 = arith.cmpf ogt, %77, %62 : vector<8x128xf32>
      %79 = arith.select %78, %69, %60 : vector<8x128xi1>, vector<8x128xf32>
      %80 = arith.select %78, %74, %61 : vector<8x128xi1>, vector<8x128xf32>
      %81 = arith.select %78, %77, %62 : vector<8x128xi1>, vector<8x128xf32>
      %c0_i32_62 = arith.constant 0 : i32
      %c0_i32_63 = arith.constant 0 : i32
      %c0_i32_64 = arith.constant 0 : i32
      %82 = tpu.memref_slice %arg3[%c0_i32, %c0_i32_62, %c0_i32_63, %c0_i32_64] : memref<2x18x18x128xf32, #tpu.memory_space<vmem>> -> memref<1x18x18x128xf32, #tpu.memory_space<vmem>>
      %83 = tpu.memref_squeeze %82 : memref<1x18x18x128xf32, #tpu.memory_space<vmem>> -> memref<18x18x128xf32, #tpu.memory_space<vmem>>
      %84 = arith.index_cast %64 : i32 to index
      %c1_65 = arith.constant 1 : index
      %c0_66 = arith.constant 0 : index
      %85 = tpu.strided_load %83[%84, %c1_65, %c0_66] {strides = array<i32: 1, 2, 1>} : memref<18x18x128xf32, #tpu.memory_space<vmem>>, vector<1x8x128xf32>
      %86 = vector.shape_cast %85 : vector<1x8x128xf32> to vector<8x128xf32>
      %c0_i32_67 = arith.constant 0 : i32
      %c0_i32_68 = arith.constant 0 : i32
      %c0_i32_69 = arith.constant 0 : i32
      %87 = tpu.memref_slice %arg3[%c1_i32, %c0_i32_67, %c0_i32_68, %c0_i32_69] : memref<2x18x18x128xf32, #tpu.memory_space<vmem>> -> memref<1x18x18x128xf32, #tpu.memory_space<vmem>>
      %88 = tpu.memref_squeeze %87 : memref<1x18x18x128xf32, #tpu.memory_space<vmem>> -> memref<18x18x128xf32, #tpu.memory_space<vmem>>
      %89 = arith.index_cast %64 : i32 to index
      %c1_70 = arith.constant 1 : index
      %c0_71 = arith.constant 0 : index
      %90 = tpu.strided_load %88[%89, %c1_70, %c0_71] {strides = array<i32: 1, 2, 1>} : memref<18x18x128xf32, #tpu.memory_space<vmem>>, vector<1x8x128xf32>
      %91 = vector.shape_cast %90 : vector<1x8x128xf32> to vector<8x128xf32>
      %92 = arith.mulf %86, %86 : vector<8x128xf32>
      %93 = arith.mulf %91, %91 : vector<8x128xf32>
      %94 = arith.addf %92, %93 : vector<8x128xf32>
      %95 = arith.cmpf ogt, %94, %81 : vector<8x128xf32>
      %96 = arith.select %95, %86, %79 : vector<8x128xi1>, vector<8x128xf32>
      %97 = arith.select %95, %91, %80 : vector<8x128xi1>, vector<8x128xf32>
      %98 = arith.select %95, %94, %81 : vector<8x128xi1>, vector<8x128xf32>
      %c0_i32_72 = arith.constant 0 : i32
      %c0_i32_73 = arith.constant 0 : i32
      %c0_i32_74 = arith.constant 0 : i32
      %99 = tpu.memref_slice %arg3[%c0_i32, %c0_i32_72, %c0_i32_73, %c0_i32_74] : memref<2x18x18x128xf32, #tpu.memory_space<vmem>> -> memref<1x18x18x128xf32, #tpu.memory_space<vmem>>
      %100 = tpu.memref_squeeze %99 : memref<1x18x18x128xf32, #tpu.memory_space<vmem>> -> memref<18x18x128xf32, #tpu.memory_space<vmem>>
      %101 = arith.index_cast %64 : i32 to index
      %c2_75 = arith.constant 2 : index
      %c0_76 = arith.constant 0 : index
      %102 = tpu.strided_load %100[%101, %c2_75, %c0_76] {strides = array<i32: 1, 2, 1>} : memref<18x18x128xf32, #tpu.memory_space<vmem>>, vector<1x8x128xf32>
      %103 = vector.shape_cast %102 : vector<1x8x128xf32> to vector<8x128xf32>
      %c0_i32_77 = arith.constant 0 : i32
      %c0_i32_78 = arith.constant 0 : i32
      %c0_i32_79 = arith.constant 0 : i32
      %104 = tpu.memref_slice %arg3[%c1_i32, %c0_i32_77, %c0_i32_78, %c0_i32_79] : memref<2x18x18x128xf32, #tpu.memory_space<vmem>> -> memref<1x18x18x128xf32, #tpu.memory_space<vmem>>
      %105 = tpu.memref_squeeze %104 : memref<1x18x18x128xf32, #tpu.memory_space<vmem>> -> memref<18x18x128xf32, #tpu.memory_space<vmem>>
      %106 = arith.index_cast %64 : i32 to index
      %c2_80 = arith.constant 2 : index
      %c0_81 = arith.constant 0 : index
      %107 = tpu.strided_load %105[%106, %c2_80, %c0_81] {strides = array<i32: 1, 2, 1>} : memref<18x18x128xf32, #tpu.memory_space<vmem>>, vector<1x8x128xf32>
      %108 = vector.shape_cast %107 : vector<1x8x128xf32> to vector<8x128xf32>
      %109 = arith.mulf %103, %103 : vector<8x128xf32>
      %110 = arith.mulf %108, %108 : vector<8x128xf32>
      %111 = arith.addf %109, %110 : vector<8x128xf32>
      %112 = arith.cmpf ogt, %111, %98 : vector<8x128xf32>
      %113 = arith.select %112, %103, %96 : vector<8x128xi1>, vector<8x128xf32>
      %114 = arith.select %112, %108, %97 : vector<8x128xi1>, vector<8x128xf32>
      %115 = arith.select %112, %111, %98 : vector<8x128xi1>, vector<8x128xf32>
      %c2_i32_82 = arith.constant 2 : i32
      %116 = arith.muli %6, %c2_i32_82 : i32
      %c2_i32_83 = arith.constant 2 : i32
      %117 = arith.addi %116, %c2_i32_83 : i32
      %c0_i32_84 = arith.constant 0 : i32
      %c0_i32_85 = arith.constant 0 : i32
      %c0_i32_86 = arith.constant 0 : i32
      %118 = tpu.memref_slice %arg3[%c0_i32, %c0_i32_84, %c0_i32_85, %c0_i32_86] : memref<2x18x18x128xf32, #tpu.memory_space<vmem>> -> memref<1x18x18x128xf32, #tpu.memory_space<vmem>>
      %119 = tpu.memref_squeeze %118 : memref<1x18x18x128xf32, #tpu.memory_space<vmem>> -> memref<18x18x128xf32, #tpu.memory_space<vmem>>
      %120 = arith.index_cast %117 : i32 to index
      %c0_87 = arith.constant 0 : index
      %c0_88 = arith.constant 0 : index
      %121 = tpu.strided_load %119[%120, %c0_87, %c0_88] {strides = array<i32: 1, 2, 1>} : memref<18x18x128xf32, #tpu.memory_space<vmem>>, vector<1x8x128xf32>
      %122 = vector.shape_cast %121 : vector<1x8x128xf32> to vector<8x128xf32>
      %c0_i32_89 = arith.constant 0 : i32
      %c0_i32_90 = arith.constant 0 : i32
      %c0_i32_91 = arith.constant 0 : i32
      %123 = tpu.memref_slice %arg3[%c1_i32, %c0_i32_89, %c0_i32_90, %c0_i32_91] : memref<2x18x18x128xf32, #tpu.memory_space<vmem>> -> memref<1x18x18x128xf32, #tpu.memory_space<vmem>>
      %124 = tpu.memref_squeeze %123 : memref<1x18x18x128xf32, #tpu.memory_space<vmem>> -> memref<18x18x128xf32, #tpu.memory_space<vmem>>
      %125 = arith.index_cast %117 : i32 to index
      %c0_92 = arith.constant 0 : index
      %c0_93 = arith.constant 0 : index
      %126 = tpu.strided_load %124[%125, %c0_92, %c0_93] {strides = array<i32: 1, 2, 1>} : memref<18x18x128xf32, #tpu.memory_space<vmem>>, vector<1x8x128xf32>
      %127 = vector.shape_cast %126 : vector<1x8x128xf32> to vector<8x128xf32>
      %128 = arith.mulf %122, %122 : vector<8x128xf32>
      %129 = arith.mulf %127, %127 : vector<8x128xf32>
      %130 = arith.addf %128, %129 : vector<8x128xf32>
      %131 = arith.cmpf ogt, %130, %115 : vector<8x128xf32>
      %132 = arith.select %131, %122, %113 : vector<8x128xi1>, vector<8x128xf32>
      %133 = arith.select %131, %127, %114 : vector<8x128xi1>, vector<8x128xf32>
      %134 = arith.select %131, %130, %115 : vector<8x128xi1>, vector<8x128xf32>
      %c0_i32_94 = arith.constant 0 : i32
      %c0_i32_95 = arith.constant 0 : i32
      %c0_i32_96 = arith.constant 0 : i32
      %135 = tpu.memref_slice %arg3[%c0_i32, %c0_i32_94, %c0_i32_95, %c0_i32_96] : memref<2x18x18x128xf32, #tpu.memory_space<vmem>> -> memref<1x18x18x128xf32, #tpu.memory_space<vmem>>
      %136 = tpu.memref_squeeze %135 : memref<1x18x18x128xf32, #tpu.memory_space<vmem>> -> memref<18x18x128xf32, #tpu.memory_space<vmem>>
      %137 = arith.index_cast %117 : i32 to index
      %c1_97 = arith.constant 1 : index
      %c0_98 = arith.constant 0 : index
      %138 = tpu.strided_load %136[%137, %c1_97, %c0_98] {strides = array<i32: 1, 2, 1>} : memref<18x18x128xf32, #tpu.memory_space<vmem>>, vector<1x8x128xf32>
      %139 = vector.shape_cast %138 : vector<1x8x128xf32> to vector<8x128xf32>
      %c0_i32_99 = arith.constant 0 : i32
      %c0_i32_100 = arith.constant 0 : i32
      %c0_i32_101 = arith.constant 0 : i32
      %140 = tpu.memref_slice %arg3[%c1_i32, %c0_i32_99, %c0_i32_100, %c0_i32_101] : memref<2x18x18x128xf32, #tpu.memory_space<vmem>> -> memref<1x18x18x128xf32, #tpu.memory_space<vmem>>
      %141 = tpu.memref_squeeze %140 : memref<1x18x18x128xf32, #tpu.memory_space<vmem>> -> memref<18x18x128xf32, #tpu.memory_space<vmem>>
      %142 = arith.index_cast %117 : i32 to index
      %c1_102 = arith.constant 1 : index
      %c0_103 = arith.constant 0 : index
      %143 = tpu.strided_load %141[%142, %c1_102, %c0_103] {strides = array<i32: 1, 2, 1>} : memref<18x18x128xf32, #tpu.memory_space<vmem>>, vector<1x8x128xf32>
      %144 = vector.shape_cast %143 : vector<1x8x128xf32> to vector<8x128xf32>
      %145 = arith.mulf %139, %139 : vector<8x128xf32>
      %146 = arith.mulf %144, %144 : vector<8x128xf32>
      %147 = arith.addf %145, %146 : vector<8x128xf32>
      %148 = arith.cmpf ogt, %147, %134 : vector<8x128xf32>
      %149 = arith.select %148, %139, %132 : vector<8x128xi1>, vector<8x128xf32>
      %150 = arith.select %148, %144, %133 : vector<8x128xi1>, vector<8x128xf32>
      %151 = arith.select %148, %147, %134 : vector<8x128xi1>, vector<8x128xf32>
      %c0_i32_104 = arith.constant 0 : i32
      %c0_i32_105 = arith.constant 0 : i32
      %c0_i32_106 = arith.constant 0 : i32
      %152 = tpu.memref_slice %arg3[%c0_i32, %c0_i32_104, %c0_i32_105, %c0_i32_106] : memref<2x18x18x128xf32, #tpu.memory_space<vmem>> -> memref<1x18x18x128xf32, #tpu.memory_space<vmem>>
      %153 = tpu.memref_squeeze %152 : memref<1x18x18x128xf32, #tpu.memory_space<vmem>> -> memref<18x18x128xf32, #tpu.memory_space<vmem>>
      %154 = arith.index_cast %117 : i32 to index
      %c2_107 = arith.constant 2 : index
      %c0_108 = arith.constant 0 : index
      %155 = tpu.strided_load %153[%154, %c2_107, %c0_108] {strides = array<i32: 1, 2, 1>} : memref<18x18x128xf32, #tpu.memory_space<vmem>>, vector<1x8x128xf32>
      %156 = vector.shape_cast %155 : vector<1x8x128xf32> to vector<8x128xf32>
      %c0_i32_109 = arith.constant 0 : i32
      %c0_i32_110 = arith.constant 0 : i32
      %c0_i32_111 = arith.constant 0 : i32
      %157 = tpu.memref_slice %arg3[%c1_i32, %c0_i32_109, %c0_i32_110, %c0_i32_111] : memref<2x18x18x128xf32, #tpu.memory_space<vmem>> -> memref<1x18x18x128xf32, #tpu.memory_space<vmem>>
      %158 = tpu.memref_squeeze %157 : memref<1x18x18x128xf32, #tpu.memory_space<vmem>> -> memref<18x18x128xf32, #tpu.memory_space<vmem>>
      %159 = arith.index_cast %117 : i32 to index
      %c2_112 = arith.constant 2 : index
      %c0_113 = arith.constant 0 : index
      %160 = tpu.strided_load %158[%159, %c2_112, %c0_113] {strides = array<i32: 1, 2, 1>} : memref<18x18x128xf32, #tpu.memory_space<vmem>>, vector<1x8x128xf32>
      %161 = vector.shape_cast %160 : vector<1x8x128xf32> to vector<8x128xf32>
      %162 = arith.mulf %156, %156 : vector<8x128xf32>
      %163 = arith.mulf %161, %161 : vector<8x128xf32>
      %164 = arith.addf %162, %163 : vector<8x128xf32>
      %165 = arith.cmpf ogt, %164, %151 : vector<8x128xf32>
      %166 = arith.select %165, %156, %149 : vector<8x128xi1>, vector<8x128xf32>
      %167 = arith.select %165, %161, %150 : vector<8x128xi1>, vector<8x128xf32>
      %c0_i32_114 = arith.constant 0 : i32
      %c0_i32_115 = arith.constant 0 : i32
      %c0_i32_116 = arith.constant 0 : i32
      %168 = tpu.memref_slice %arg2[%c0_i32_10, %c0_i32_114, %c0_i32_115, %c0_i32_116] : memref<2x8x8x128xf32, #tpu.memory_space<vmem>> -> memref<1x8x8x128xf32, #tpu.memory_space<vmem>>
      %169 = tpu.memref_squeeze %168 : memref<1x8x8x128xf32, #tpu.memory_space<vmem>> -> memref<8x8x128xf32, #tpu.memory_space<vmem>>
      %170 = arith.index_cast %6 : i32 to index
      %c0_117 = arith.constant 0 : index
      %c0_118 = arith.constant 0 : index
      %171 = vector.load %169[%170, %c0_117, %c0_118] : memref<8x8x128xf32, #tpu.memory_space<vmem>>, vector<1x8x128xf32>
      %172 = vector.shape_cast %171 : vector<1x8x128xf32> to vector<8x128xf32>
      %173 = vector.shape_cast %166 : vector<8x128xf32> to vector<1x8x128xf32>
      tpu.vector_store %169[%170, %c0_117, %c0_118], %173 {strides = array<i32>} : memref<8x8x128xf32, #tpu.memory_space<vmem>>, vector<1x8x128xf32>,
      %c0_i32_119 = arith.constant 0 : i32
      %c0_i32_120 = arith.constant 0 : i32
      %c0_i32_121 = arith.constant 0 : i32
      %174 = tpu.memref_slice %arg2[%c1_i32_11, %c0_i32_119, %c0_i32_120, %c0_i32_121] : memref<2x8x8x128xf32, #tpu.memory_space<vmem>> -> memref<1x8x8x128xf32, #tpu.memory_space<vmem>>
      %175 = tpu.memref_squeeze %174 : memref<1x8x8x128xf32, #tpu.memory_space<vmem>> -> memref<8x8x128xf32, #tpu.memory_space<vmem>>
      %176 = arith.index_cast %6 : i32 to index
      %c0_122 = arith.constant 0 : index
      %c0_123 = arith.constant 0 : index
      %177 = vector.load %175[%176, %c0_122, %c0_123] : memref<8x8x128xf32, #tpu.memory_space<vmem>>, vector<1x8x128xf32>
      %178 = vector.shape_cast %177 : vector<1x8x128xf32> to vector<8x128xf32>
      %179 = vector.shape_cast %167 : vector<8x128xf32> to vector<1x8x128xf32>
      tpu.vector_store %175[%176, %c0_122, %c0_123], %179 {strides = array<i32>} : memref<8x8x128xf32, #tpu.memory_space<vmem>>, vector<1x8x128xf32>,
    }
    %c8_i32_14 = arith.constant 8 : i32
    return
  }
  func.func @transform_0(%arg0: i32) -> (i32, i32, i32, i32) {
    %c0_i32 = arith.constant 0 : i32
    %c0_i32_0 = arith.constant 0 : i32
    %c0_i32_1 = arith.constant 0 : i32
    %c0_i32_2 = arith.constant 0 : i32
    return %c0_i32, %c0_i32_0, %c0_i32_1, %arg0 : i32, i32, i32, i32
  }
  func.func @transform_1(%arg0: i32) -> (i32, i32, i32, i32) {
    %c0_i32 = arith.constant 0 : i32
    %c0_i32_0 = arith.constant 0 : i32
    %c0_i32_1 = arith.constant 0 : i32
    %c0_i32_2 = arith.constant 0 : i32
    return %c0_i32, %c0_i32_0, %c0_i32_1, %arg0 : i32, i32, i32, i32
  }
}

</mosaic_0001>

<llo_original>
// kernel: custom-call.1
$region0: #{custom-call.1}
  %s0 = inlined_call_operand.hbm [shape: c64[2,4,16,16], index: 0, kind: input, shape index: {}]
  %s1 = inlined_call_operand.vmem [shape: f32[2,4,16,16], index: 1, kind: output, shape index: {}]
  %s2 = scalar_lea.hbm %s0, 2048
  $region1: #{custom-call.1} parent=0
    #allocation0 [shape = 's32[1]{0}', space=sflag, size = 0x4, scoped, tag = 'scoped memory for custom-call.1']
    %3 = vsyncpa [#allocation0], 0
    %s4 = sshll.u32 %s1, 4
    %s5 = int_to_ptr.vmem [resolvable:$true] %s4
    %7 = dma.hbm_to_vmem [thread:$0]  %s2, 2048, %s5, [#allocation0]
    %8 = dma.done [#allocation0], 2048
    %9 = vsyncpa [#allocation0], 1

// kernel: custom-call
$region0: #{custom-call}
  %s0 = inlined_call_operand.hbm [shape: c64[2,4,16,16], index: 0, kind: input, shape index: {}]
  %s1 = inlined_call_operand.vmem [shape: f32[2,4,16,16], index: 1, kind: output, shape index: {}]
  $region1: #{custom-call} parent=0
    #allocation0 [shape = 's32[1]{0}', space=sflag, size = 0x4, scoped, tag = 'scoped memory for custom-call']
    %2 = vsyncpa [#allocation0], 0
    %s3 = sshll.u32 %s1, 4
    %s4 = int_to_ptr.vmem [resolvable:$true] %s3
    %6 = dma.hbm_to_vmem [thread:$0]  %s0, 2048, %s4, [#allocation0]
    %7 = dma.done [#allocation0], 2048
    %8 = vsyncpa [#allocation0], 1

// kernel: custom-call.2
$region0: #{custom-call.2}
  %s0 = inlined_call_operand.vmem [shape: f32[2,4,8,8], index: 0, kind: input, shape index: {}]
  %s1 = inlined_call_operand.vmem [shape: f32[2,4,8,8], index: 1, kind: input, shape index: {}]
  %s2 = inlined_call_operand.hbm [shape: c64[2,4,8,8], index: 2, kind: output, shape index: {}]
  %s3 = scalar_lea.hbm %s2, 1024
  $region1: #{custom-call.2} parent=0
    #allocation0 [shape = 's32[1]{0}', space=sflag, size = 0x4, scoped, tag = 'scoped memory for custom-call.2']
    %4 = vsyncpa [#allocation0], 0
    %s5 = sshll.u32 %s0, 4
    %s6 = int_to_ptr.vmem [resolvable:$true] %s5
    %8 = dma.vmem_to_hbm [thread:$0]  %s6, 1024, %s2, [#allocation0]
    %9 = dma.done [#allocation0], 1024
    %10 = vsyncpa [#allocation0], 1
  $region2: #{custom-call.2} parent=0
    #allocation1 [shape = 's32[1]{0}', space=sflag, size = 0x4, scoped, tag = 'scoped memory for custom-call.2']
    %11 = vsyncpa [#allocation1], 0
    %s12 = sshll.u32 %s1, 4
    %s13 = int_to_ptr.vmem [resolvable:$true] %s12
    %15 = dma.vmem_to_hbm [thread:$0]  %s13, 1024, %s3, [#allocation1]
    %16 = dma.done [#allocation1], 1024
    %17 = vsyncpa [#allocation1], 1

// kernel: complex_maxpool2d.1
$region0: #{complex_maxpool2d.1}
  #allocation0 [shape = 'u32[]', space=smem, size = 0x4, offset = 0x4, fixed_abs, tag = 'smem constant byte address 0x4 - core index']
  #allocation1 [shape = 'u32[144,128]{1,0:T(1,128)}', space=vmem, size = 0x12000, scoped, tag = 'internal scratch']
  #allocation2 [shape = 'f32[2,18,18,128]{3,2,1,0:T(8,128)}', space=vmem, size = 0x6c000, scoped, tag = 'scratch operand']
  %s0 = inlined_call_operand.vmem [shape: f32[2,16,16,128], index: 0, kind: input, shape index: {}]
  %s1 = inlined_call_operand.vmem [shape: f32[2,8,8,128], index: 1, kind: output, shape index: {}]
  %s2 = sld [smem:[#allocation0]]
  $region21: #{complex_maxpool2d.1} parent=0
    _
  %s4 = ssub.s32 1, %s2
  %s5 = scalar_select 0, %s4, %s2
  // Predicated region
  $region2: #{complex_maxpool2d.1} parent=0 // pred_check
    _
  $region3: #{complex_maxpool2d.1} parent=0 // pred_check_branch
    %7 = sbr.rel (0) target = $region5
  $region4: #{complex_maxpool2d.1} parent=0 // pred_region
    _
  $region5: #{complex_maxpool2d.1} parent=0 // pred_fallthru
    _
  %8 = vst [vmem:[#allocation2] sm:$0xff] 0.0
  %9 = vst [vmem:[#allocation2 + $0x8] sm:$0xff] 0.0
  %10 = vst [vmem:[#allocation2 + $0x10] sm:$0x3] 0.0
  %11 = vst [vmem:[#allocation2 + $0x18] sm:$0xff] 0.0
  %12 = vst [vmem:[#allocation2 + $0x20] sm:$0xff] 0.0
  %13 = vst [vmem:[#allocation2 + $0x28] sm:$0x3] 0.0
  %14 = vst [vmem:[#allocation2 + $0x30] sm:$0xff] 0.0
  %15 = vst [vmem:[#allocation2 + $0x38] sm:$0xff] 0.0
  %16 = vst [vmem:[#allocation2 + $0x40] sm:$0x3] 0.0
  %17 = vst [vmem:[#allocation2 + $0x48] sm:$0xff] 0.0
  %18 = vst [vmem:[#allocation2 + $0x50] sm:$0xff] 0.0
  %19 = vst [vmem:[#allocation2 + $0x58] sm:$0x3] 0.0
  %20 = vst [vmem:[#allocation2 + $0x60] sm:$0xff] 0.0
  %21 = vst [vmem:[#allocation2 + $0x68] sm:$0xff] 0.0
  %22 = vst [vmem:[#allocation2 + $0x70] sm:$0x3] 0.0
  %23 = vst [vmem:[#allocation2 + $0x78] sm:$0xff] 0.0
  %24 = vst [vmem:[#allocation2 + $0x80] sm:$0xff] 0.0
  %25 = vst [vmem:[#allocation2 + $0x88] sm:$0x3] 0.0
  %26 = vst [vmem:[#allocation2 + $0x90] sm:$0xff] 0.0
  %27 = vst [vmem:[#allocation2 + $0x98] sm:$0xff] 0.0
  %28 = vst [vmem:[#allocation2 + $0xa0] sm:$0x3] 0.0
  %29 = vst [vmem:[#allocation2 + $0xa8] sm:$0xff] 0.0
  %30 = vst [vmem:[#allocation2 + $0xb0] sm:$0xff] 0.0
  %31 = vst [vmem:[#allocation2 + $0xb8] sm:$0x3] 0.0
  %32 = vst [vmem:[#allocation2 + $0xc0] sm:$0xff] 0.0
  %33 = vst [vmem:[#allocation2 + $0xc8] sm:$0xff] 0.0
  %34 = vst [vmem:[#allocation2 + $0xd0] sm:$0x3] 0.0
  %35 = vst [vmem:[#allocation2 + $0xd8] sm:$0xff] 0.0
  %36 = vst [vmem:[#allocation2 + $0xe0] sm:$0xff] 0.0
  %37 = vst [vmem:[#allocation2 + $0xe8] sm:$0x3] 0.0
  %38 = vst [vmem:[#allocation2 + $0xf0] sm:$0xff] 0.0
  %39 = vst [vmem:[#allocation2 + $0xf8] sm:$0xff] 0.0
  %40 = vst [vmem:[#allocation2 + $0x100] sm:$0x3] 0.0
  %41 = vst [vmem:[#allocation2 + $0x108] sm:$0xff] 0.0
  %42 = vst [vmem:[#allocation2 + $0x110] sm:$0xff] 0.0
  %43 = vst [vmem:[#allocation2 + $0x118] sm:$0x3] 0.0
  %44 = vst [vmem:[#allocation2 + $0x120] sm:$0xff] 0.0
  %45 = vst [vmem:[#allocation2 + $0x128] sm:$0xff] 0.0
  %46 = vst [vmem:[#allocation2 + $0x130] sm:$0x3] 0.0
  %47 = vst [vmem:[#allocation2 + $0x138] sm:$0xff] 0.0
  %48 = vst [vmem:[#allocation2 + $0x140] sm:$0xff] 0.0
  %49 = vst [vmem:[#allocation2 + $0x148] sm:$0x3] 0.0
  %50 = vst [vmem:[#allocation2 + $0x150] sm:$0xff] 0.0
  %51 = vst [vmem:[#allocation2 + $0x158] sm:$0xff] 0.0
  %52 = vst [vmem:[#allocation2 + $0x160] sm:$0x3] 0.0
  %53 = vst [vmem:[#allocation2 + $0x168] sm:$0xff] 0.0
  %54 = vst [vmem:[#allocation2 + $0x170] sm:$0xff] 0.0
  %55 = vst [vmem:[#allocation2 + $0x178] sm:$0x3] 0.0
  %56 = vst [vmem:[#allocation2 + $0x180] sm:$0xff] 0.0
  %57 = vst [vmem:[#allocation2 + $0x188] sm:$0xff] 0.0
  %58 = vst [vmem:[#allocation2 + $0x190] sm:$0x3] 0.0
  %59 = vst [vmem:[#allocation2 + $0x198] sm:$0xff] 0.0
  %60 = vst [vmem:[#allocation2 + $0x1a0] sm:$0xff] 0.0
  %61 = vst [vmem:[#allocation2 + $0x1a8] sm:$0x3] 0.0
  %62 = vst [vmem:[#allocation2 + $0x1b0] sm:$0xff] 0.0
  %63 = vst [vmem:[#allocation2 + $0x1b8] sm:$0xff] 0.0
  %64 = vst [vmem:[#allocation2 + $0x1c0] sm:$0x3] 0.0
  %65 = vst [vmem:[#allocation2 + $0x1c8] sm:$0xff] 0.0
  %66 = vst [vmem:[#allocation2 + $0x1d0] sm:$0xff] 0.0
  %67 = vst [vmem:[#allocation2 + $0x1d8] sm:$0x3] 0.0
  %68 = vst [vmem:[#allocation2 + $0x1e0] sm:$0xff] 0.0
  %69 = vst [vmem:[#allocation2 + $0x1e8] sm:$0xff] 0.0
  %70 = vst [vmem:[#allocation2 + $0x1f0] sm:$0x3] 0.0
  %71 = vst [vmem:[#allocation2 + $0x1f8] sm:$0xff] 0.0
  %72 = vst [vmem:[#allocation2 + $0x200] sm:$0xff] 0.0
  %73 = vst [vmem:[#allocation2 + $0x208] sm:$0x3] 0.0
  %74 = vst [vmem:[#allocation2 + $0x210] sm:$0xff] 0.0
  %75 = vst [vmem:[#allocation2 + $0x218] sm:$0xff] 0.0
  %76 = vst [vmem:[#allocation2 + $0x220] sm:$0x3] 0.0
  %77 = vst [vmem:[#allocation2 + $0x228] sm:$0xff] 0.0
  %78 = vst [vmem:[#allocation2 + $0x230] sm:$0xff] 0.0
  %79 = vst [vmem:[#allocation2 + $0x238] sm:$0x3] 0.0
  %80 = vst [vmem:[#allocation2 + $0x240] sm:$0xff] 0.0
  %81 = vst [vmem:[#allocation2 + $0x248] sm:$0xff] 0.0
  %82 = vst [vmem:[#allocation2 + $0x250] sm:$0x3] 0.0
  %83 = vst [vmem:[#allocation2 + $0x258] sm:$0xff] 0.0
  %84 = vst [vmem:[#allocation2 + $0x260] sm:$0xff] 0.0
  %85 = vst [vmem:[#allocation2 + $0x268] sm:$0x3] 0.0
  %86 = vst [vmem:[#allocation2 + $0x270] sm:$0xff] 0.0
  %87 = vst [vmem:[#allocation2 + $0x278] sm:$0xff] 0.0
  %88 = vst [vmem:[#allocation2 + $0x280] sm:$0x3] 0.0
  %89 = vst [vmem:[#allocation2 + $0x288] sm:$0xff] 0.0
  %90 = vst [vmem:[#allocation2 + $0x290] sm:$0xff] 0.0
  %91 = vst [vmem:[#allocation2 + $0x298] sm:$0x3] 0.0
  %92 = vst [vmem:[#allocation2 + $0x2a0] sm:$0xff] 0.0
  %93 = vst [vmem:[#allocation2 + $0x2a8] sm:$0xff] 0.0
  %94 = vst [vmem:[#allocation2 + $0x2b0] sm:$0x3] 0.0
  %95 = vst [vmem:[#allocation2 + $0x2b8] sm:$0xff] 0.0
  %96 = vst [vmem:[#allocation2 + $0x2c0] sm:$0xff] 0.0
  %97 = vst [vmem:[#allocation2 + $0x2c8] sm:$0x3] 0.0
  %98 = vst [vmem:[#allocation2 + $0x2d0] sm:$0xff] 0.0
  %99 = vst [vmem:[#allocation2 + $0x2d8] sm:$0xff] 0.0
  %100 = vst [vmem:[#allocation2 + $0x2e0] sm:$0x3] 0.0
  %101 = vst [vmem:[#allocation2 + $0x2e8] sm:$0xff] 0.0
  %102 = vst [vmem:[#allocation2 + $0x2f0] sm:$0xff] 0.0
  %103 = vst [vmem:[#allocation2 + $0x2f8] sm:$0x3] 0.0
  %104 = vst [vmem:[#allocation2 + $0x300] sm:$0xff] 0.0
  %105 = vst [vmem:[#allocation2 + $0x308] sm:$0xff] 0.0
  %106 = vst [vmem:[#allocation2 + $0x310] sm:$0x3] 0.0
  %107 = vst [vmem:[#allocation2 + $0x318] sm:$0xff] 0.0
  %108 = vst [vmem:[#allocation2 + $0x320] sm:$0xff] 0.0
  %109 = vst [vmem:[#allocation2 + $0x328] sm:$0x3] 0.0
  %110 = vst [vmem:[#allocation2 + $0x330] sm:$0xff] 0.0
  %111 = vst [vmem:[#allocation2 + $0x338] sm:$0xff] 0.0
  %112 = vst [vmem:[#allocation2 + $0x340] sm:$0x3] 0.0
  %113 = vst [vmem:[#allocation2 + $0x348] sm:$0xff] 0.0
  %114 = vst [vmem:[#allocation2 + $0x350] sm:$0xff] 0.0
  %115 = vst [vmem:[#allocation2 + $0x358] sm:$0x3] 0.0
  %v116 = vld [vmem:[%s0] sm:$0xff]
  %v117 = vld [vmem:[%s0 + $0x8] sm:$0xff]
  %v118 = vld [vmem:[%s0 + $0x10] sm:$0xff]
  %v119 = vld [vmem:[%s0 + $0x18] sm:$0xff]
  %v120 = vld [vmem:[%s0 + $0x20] sm:$0xff]
  %v121 = vld [vmem:[%s0 + $0x28] sm:$0xff]
  %v122 = vld [vmem:[%s0 + $0x30] sm:$0xff]
  %v123 = vld [vmem:[%s0 + $0x38] sm:$0xff]
  %v124 = vld [vmem:[%s0 + $0x40] sm:$0xff]
  %v125 = vld [vmem:[%s0 + $0x48] sm:$0xff]
  %v126 = vld [vmem:[%s0 + $0x50] sm:$0xff]
  %v127 = vld [vmem:[%s0 + $0x58] sm:$0xff]
  %v128 = vld [vmem:[%s0 + $0x60] sm:$0xff]
  %v129 = vld [vmem:[%s0 + $0x68] sm:$0xff]
  %v130 = vld [vmem:[%s0 + $0x70] sm:$0xff]
  %v131 = vld [vmem:[%s0 + $0x78] sm:$0xff]
  %v132 = vld [vmem:[%s0 + $0x80] sm:$0xff]
  %v133 = vld [vmem:[%s0 + $0x88] sm:$0xff]
  %v134 = vld [vmem:[%s0 + $0x90] sm:$0xff]
  %v135 = vld [vmem:[%s0 + $0x98] sm:$0xff]
  %v136 = vld [vmem:[%s0 + $0xa0] sm:$0xff]
  %v137 = vld [vmem:[%s0 + $0xa8] sm:$0xff]
  %v138 = vld [vmem:[%s0 + $0xb0] sm:$0xff]
  %v139 = vld [vmem:[%s0 + $0xb8] sm:$0xff]
  %v140 = vld [vmem:[%s0 + $0xc0] sm:$0xff]
  %v141 = vld [vmem:[%s0 + $0xc8] sm:$0xff]
  %v142 = vld [vmem:[%s0 + $0xd0] sm:$0xff]
  %v143 = vld [vmem:[%s0 + $0xd8] sm:$0xff]
  %v144 = vld [vmem:[%s0 + $0xe0] sm:$0xff]
  %v145 = vld [vmem:[%s0 + $0xe8] sm:$0xff]
  %v146 = vld [vmem:[%s0 + $0xf0] sm:$0xff]
  %v147 = vld [vmem:[%s0 + $0xf8] sm:$0xff]
  %v148 = vld [vmem:[%s0 + $0x100] sm:$0xff]
  %v149 = vld [vmem:[%s0 + $0x108] sm:$0xff]
  %v150 = vld [vmem:[%s0 + $0x110] sm:$0xff]
  %v151 = vld [vmem:[%s0 + $0x118] sm:$0xff]
  %v152 = vld [vmem:[%s0 + $0x120] sm:$0xff]
  %v153 = vld [vmem:[%s0 + $0x128] sm:$0xff]
  %v154 = vld [vmem:[%s0 + $0x130] sm:$0xff]
  %v155 = vld [vmem:[%s0 + $0x138] sm:$0xff]
  %v156 = vld [vmem:[%s0 + $0x140] sm:$0xff]
  %v157 = vld [vmem:[%s0 + $0x148] sm:$0xff]
  %v158 = vld [vmem:[%s0 + $0x150] sm:$0xff]
  %v159 = vld [vmem:[%s0 + $0x158] sm:$0xff]
  %v160 = vld [vmem:[%s0 + $0x160] sm:$0xff]
  %v161 = vld [vmem:[%s0 + $0x168] sm:$0xff]
  %v162 = vld [vmem:[%s0 + $0x170] sm:$0xff]
  %v163 = vld [vmem:[%s0 + $0x178] sm:$0xff]
  %v164 = vld [vmem:[%s0 + $0x180] sm:$0xff]
  %v165 = vld [vmem:[%s0 + $0x188] sm:$0xff]
  %v166 = vld [vmem:[%s0 + $0x190] sm:$0xff]
  %v167 = vld [vmem:[%s0 + $0x198] sm:$0xff]
  %v168 = vld [vmem:[%s0 + $0x1a0] sm:$0xff]
  %v169 = vld [vmem:[%s0 + $0x1a8] sm:$0xff]
  %v170 = vld [vmem:[%s0 + $0x1b0] sm:$0xff]
  %v171 = vld [vmem:[%s0 + $0x1b8] sm:$0xff]
  %v172 = vld [vmem:[%s0 + $0x1c0] sm:$0xff]
  %v173 = vld [vmem:[%s0 + $0x1c8] sm:$0xff]
  %v174 = vld [vmem:[%s0 + $0x1d0] sm:$0xff]
  %v175 = vld [vmem:[%s0 + $0x1d8] sm:$0xff]
  %v176 = vld [vmem:[%s0 + $0x1e0] sm:$0xff]
  %v177 = vld [vmem:[%s0 + $0x1e8] sm:$0xff]
  %v178 = vld [vmem:[%s0 + $0x1f0] sm:$0xff]
  %v179 = vld [vmem:[%s0 + $0x1f8] sm:$0xff]
  %s180 = scalar_lea.vmem [#allocation2], 24
  %181 = vst [vmem:[%s180 + $0x1] sm:$0xff] %v116
  %182 = vst [vmem:[%s180 + $0x9] sm:$0xff] %v117
  %183 = vst [vmem:[%s180 + $0x19] sm:$0xff] %v118
  %184 = vst [vmem:[%s180 + $0x21] sm:$0xff] %v119
  %185 = vst [vmem:[%s180 + $0x31] sm:$0xff] %v120
  %186 = vst [vmem:[%s180 + $0x39] sm:$0xff] %v121
  %187 = vst [vmem:[%s180 + $0x49] sm:$0xff] %v122
  %188 = vst [vmem:[%s180 + $0x51] sm:$0xff] %v123
  %189 = vst [vmem:[%s180 + $0x61] sm:$0xff] %v124
  %190 = vst [vmem:[%s180 + $0x69] sm:$0xff] %v125
  %191 = vst [vmem:[%s180 + $0x79] sm:$0xff] %v126
  %192 = vst [vmem:[%s180 + $0x81] sm:$0xff] %v127
  %193 = vst [vmem:[%s180 + $0x91] sm:$0xff] %v128
  %194 = vst [vmem:[%s180 + $0x99] sm:$0xff] %v129
  %195 = vst [vmem:[%s180 + $0xa9] sm:$0xff] %v130
  %196 = vst [vmem:[%s180 + $0xb1] sm:$0xff] %v131
  %197 = vst [vmem:[%s180 + $0xc1] sm:$0xff] %v132
  %198 = vst [vmem:[%s180 + $0xc9] sm:$0xff] %v133
  %199 = vst [vmem:[%s180 + $0xd9] sm:$0xff] %v134
  %200 = vst [vmem:[%s180 + $0xe1] sm:$0xff] %v135
  %201 = vst [vmem:[%s180 + $0xf1] sm:$0xff] %v136
  %202 = vst [vmem:[%s180 + $0xf9] sm:$0xff] %v137
  %203 = vst [vmem:[%s180 + $0x109] sm:$0xff] %v138
  %204 = vst [vmem:[%s180 + $0x111] sm:$0xff] %v139
  %205 = vst [vmem:[%s180 + $0x121] sm:$0xff] %v140
  %206 = vst [vmem:[%s180 + $0x129] sm:$0xff] %v141
  %207 = vst [vmem:[%s180 + $0x139] sm:$0xff] %v142
  %208 = vst [vmem:[%s180 + $0x141] sm:$0xff] %v143
  %209 = vst [vmem:[%s180 + $0x151] sm:$0xff] %v144
  %210 = vst [vmem:[%s180 + $0x159] sm:$0xff] %v145
  %211 = vst [vmem:[%s180 + $0x169] sm:$0xff] %v146
  %212 = vst [vmem:[%s180 + $0x171] sm:$0xff] %v147
  %213 = vst [vmem:[%s180 + $0x1b1] sm:$0xff] %v148
  %214 = vst [vmem:[%s180 + $0x1b9] sm:$0xff] %v149
  %215 = vst [vmem:[%s180 + $0x1c9] sm:$0xff] %v150
  %216 = vst [vmem:[%s180 + $0x1d1] sm:$0xff] %v151
  %217 = vst [vmem:[%s180 + $0x1e1] sm:$0xff] %v152
  %218 = vst [vmem:[%s180 + $0x1e9] sm:$0xff] %v153
  %219 = vst [vmem:[%s180 + $0x1f9] sm:$0xff] %v154
  %220 = vst [vmem:[%s180 + $0x201] sm:$0xff] %v155
  %221 = vst [vmem:[%s180 + $0x211] sm:$0xff] %v156
  %222 = vst [vmem:[%s180 + $0x219] sm:$0xff] %v157
  %223 = vst [vmem:[%s180 + $0x229] sm:$0xff] %v158
  %224 = vst [vmem:[%s180 + $0x231] sm:$0xff] %v159
  %225 = vst [vmem:[%s180 + $0x241] sm:$0xff] %v160
  %226 = vst [vmem:[%s180 + $0x249] sm:$0xff] %v161
  %227 = vst [vmem:[%s180 + $0x259] sm:$0xff] %v162
  %228 = vst [vmem:[%s180 + $0x261] sm:$0xff] %v163
  %229 = vst [vmem:[%s180 + $0x271] sm:$0xff] %v164
  %230 = vst [vmem:[%s180 + $0x279] sm:$0xff] %v165
  %231 = vst [vmem:[%s180 + $0x289] sm:$0xff] %v166
  %232 = vst [vmem:[%s180 + $0x291] sm:$0xff] %v167
  %233 = vst [vmem:[%s180 + $0x2a1] sm:$0xff] %v168
  %234 = vst [vmem:[%s180 + $0x2a9] sm:$0xff] %v169
  %235 = vst [vmem:[%s180 + $0x2b9] sm:$0xff] %v170
  %236 = vst [vmem:[%s180 + $0x2c1] sm:$0xff] %v171
  %237 = vst [vmem:[%s180 + $0x2d1] sm:$0xff] %v172
  %238 = vst [vmem:[%s180 + $0x2d9] sm:$0xff] %v173
  %239 = vst [vmem:[%s180 + $0x2e9] sm:$0xff] %v174
  %240 = vst [vmem:[%s180 + $0x2f1] sm:$0xff] %v175
  %241 = vst [vmem:[%s180 + $0x301] sm:$0xff] %v176
  %242 = vst [vmem:[%s180 + $0x309] sm:$0xff] %v177
  %243 = vst [vmem:[%s180 + $0x319] sm:$0xff] %v178
  %244 = vst [vmem:[%s180 + $0x321] sm:$0xff] %v179
  loop: start=0, step=1, limit=8
  $region6: #{complex_maxpool2d.1} parent=0 // loop_pre_header
    _
  $region7: #{complex_maxpool2d.1} parent=0 // loop_header
    %s246 = sphi 0, %s250
    %p247 = scmp.ge.s32.totalorder %s246, 8
  $region8: #{complex_maxpool2d.1} parent=0 // loop_header_branch
    %249 = sbr.rel (%p247) target = $region12
  $region9: #{complex_maxpool2d.1} parent=0 // loop_body
    %s251 = smul.u32 %s246, 2
    %s252 = smul.u32 %s251, 24
    %s253 = scalar_lea.vmem [#allocation2], %s252
    %v254 = vld [vmem:[%s253] ss:$2 sm:$0xff]
    %s255 = scalar_lea.vmem [#allocation2], 432
    %s256 = scalar_lea.vmem %s255, %s252 [#allocation2]
    %v257 = vld [vmem:[%s256] ss:$2 sm:$0xff]
    %v258 = vmul.f32 %v254, %v254
    %v259 = vmul.f32 %v257, %v257
    %v260 = vadd.f32 %v258, %v259
    %vm261 = vcmp.gt.f32.partialorder %v260, -1.0
    %v262 = vsel %vm261, %v254, 0.0
    %v263 = vsel %vm261, %v257, 0.0
    %v264 = vsel %vm261, %v260, -1.0
    %s265 = scalar_lea.vmem %s253, 1 [#allocation2]
    %v266 = vld [vmem:[%s265] ss:$2 sm:$0xff]
    %s267 = scalar_lea.vmem %s256, 1 [#allocation2]
    %v268 = vld [vmem:[%s267] ss:$2 sm:$0xff]
    %v269 = vmul.f32 %v266, %v266
    %v270 = vmul.f32 %v268, %v268
    %v271 = vadd.f32 %v269, %v270
    %vm272 = vcmp.gt.f32.partialorder %v271, %v264
    %v273 = vsel %vm272, %v266, %v262
    %v274 = vsel %vm272, %v268, %v263
    %v275 = vsel %vm272, %v271, %v264
    %s276 = scalar_lea.vmem %s253, 2 [#allocation2]
    %v277 = vld [vmem:[%s276] ss:$2 sm:$0xff]
    %s278 = scalar_lea.vmem %s256, 2 [#allocation2]
    %v279 = vld [vmem:[%s278] ss:$2 sm:$0xff]
    %v280 = vmul.f32 %v277, %v277
    %v281 = vmul.f32 %v279, %v279
    %v282 = vadd.f32 %v280, %v281
    %vm283 = vcmp.gt.f32.partialorder %v282, %v275
    %v284 = vsel %vm283, %v277, %v273
    %v285 = vsel %vm283, %v279, %v274
    %v286 = vsel %vm283, %v282, %v275
    %s287 = sadd.s32 %s251, 1
    %s288 = smul.u32 %s287, 24
    %s289 = scalar_lea.vmem [#allocation2], %s288
    %v290 = vld [vmem:[%s289] ss:$2 sm:$0xff]
    %s291 = scalar_lea.vmem %s255, %s288 [#allocation2]
    %v292 = vld [vmem:[%s291] ss:$2 sm:$0xff]
    %v293 = vmul.f32 %v290, %v290
    %v294 = vmul.f32 %v292, %v292
    %v295 = vadd.f32 %v293, %v294
    %vm296 = vcmp.gt.f32.partialorder %v295, %v286
    %v297 = vsel %vm296, %v290, %v284
    %v298 = vsel %vm296, %v292, %v285
    %v299 = vsel %vm296, %v295, %v286
    %s300 = scalar_lea.vmem %s289, 1 [#allocation2]
    %v301 = vld [vmem:[%s300] ss:$2 sm:$0xff]
    %s302 = scalar_lea.vmem %s291, 1 [#allocation2]
    %v303 = vld [vmem:[%s302] ss:$2 sm:$0xff]
    %v304 = vmul.f32 %v301, %v301
    %v305 = vmul.f32 %v303, %v303
    %v306 = vadd.f32 %v304, %v305
    %vm307 = vcmp.gt.f32.partialorder %v306, %v299
    %v308 = vsel %vm307, %v301, %v297
    %v309 = vsel %vm307, %v303, %v298
    %v310 = vsel %vm307, %v306, %v299
    %s311 = scalar_lea.vmem %s289, 2 [#allocation2]
    %v312 = vld [vmem:[%s311] ss:$2 sm:$0xff]
    %s313 = scalar_lea.vmem %s291, 2 [#allocation2]
    %v314 = vld [vmem:[%s313] ss:$2 sm:$0xff]
    %v315 = vmul.f32 %v312, %v312
    %v316 = vmul.f32 %v314, %v314
    %v317 = vadd.f32 %v315, %v316
    %vm318 = vcmp.gt.f32.partialorder %v317, %v310
    %v319 = vsel %vm318, %v312, %v308
    %v320 = vsel %vm318, %v314, %v309
    %v321 = vsel %vm318, %v317, %v310
    %s322 = sadd.s32 %s251, 2
    %s323 = smul.u32 %s322, 24
    %s324 = scalar_lea.vmem [#allocation2], %s323
    %v325 = vld [vmem:[%s324] ss:$2 sm:$0xff]
    %s326 = scalar_lea.vmem %s255, %s323 [#allocation2]
    %v327 = vld [vmem:[%s326] ss:$2 sm:$0xff]
    %v328 = vmul.f32 %v325, %v325
    %v329 = vmul.f32 %v327, %v327
    %v330 = vadd.f32 %v328, %v329
    %vm331 = vcmp.gt.f32.partialorder %v330, %v321
    %v332 = vsel %vm331, %v325, %v319
    %v333 = vsel %vm331, %v327, %v320
    %v334 = vsel %vm331, %v330, %v321
    %s335 = scalar_lea.vmem %s324, 1 [#allocation2]
    %v336 = vld [vmem:[%s335] ss:$2 sm:$0xff]
    %s337 = scalar_lea.vmem %s326, 1 [#allocation2]
    %v338 = vld [vmem:[%s337] ss:$2 sm:$0xff]
    %v339 = vmul.f32 %v336, %v336
    %v340 = vmul.f32 %v338, %v338
    %v341 = vadd.f32 %v339, %v340
    %vm342 = vcmp.gt.f32.partialorder %v341, %v334
    %v343 = vsel %vm342, %v336, %v332
    %v344 = vsel %vm342, %v338, %v333
    %v345 = vsel %vm342, %v341, %v334
    %s346 = scalar_lea.vmem %s324, 2 [#allocation2]
    %v347 = vld [vmem:[%s346] ss:$2 sm:$0xff]
    %s348 = scalar_lea.vmem %s326, 2 [#allocation2]
    %v349 = vld [vmem:[%s348] ss:$2 sm:$0xff]
    %v350 = vmul.f32 %v347, %v347
    %v351 = vmul.f32 %v349, %v349
    %v352 = vadd.f32 %v350, %v351
    %vm353 = vcmp.gt.f32.partialorder %v352, %v345
    %v354 = vsel %vm353, %v347, %v343
    %v355 = vsel %vm353, %v349, %v344
    %s356 = smul.u32 %s246, 8
    %s357 = scalar_lea.vmem %s1, %s356
    %358 = vst [vmem:[%s357] sm:$0xff] %v354
    %s359 = scalar_lea.vmem %s1, 64
    %s360 = scalar_lea.vmem %s359, %s356
    %361 = vst [vmem:[%s360] sm:$0xff] %v355
  $region10: #{complex_maxpool2d.1} parent=0 // loop_footer
    %s250 = sadd.s32 1, %s246
  $region11: #{complex_maxpool2d.1} parent=0 // loop_footer_branch
    %245 = sbr.rel target = $region7
  $region12: #{complex_maxpool2d.1} parent=0 // loop_exit
    _
  // Predicated region
  $region13: #{complex_maxpool2d.1} parent=0 // pred_check
    _
  $region14: #{complex_maxpool2d.1} parent=0 // pred_check_branch
    %363 = sbr.rel (0) target = $region16
  $region15: #{complex_maxpool2d.1} parent=0 // pred_region
    _
  $region16: #{complex_maxpool2d.1} parent=0 // pred_fallthru
    _
  // Predicated region
  $region17: #{complex_maxpool2d.1} parent=0 // pred_check
    _
  $region18: #{complex_maxpool2d.1} parent=0 // pred_check_branch
    %365 = sbr.rel (0) target = $region20
  $region19: #{complex_maxpool2d.1} parent=0 // pred_region
    _
  $region20: #{complex_maxpool2d.1} parent=0 // pred_fallthru
    _

</llo_original>
